<compile_context>
chip_gen: v5e
topology: v5e:2x2
jax: 0.10.0
libtpu: 0.0.40
codegen_flags: <defaults>
</compile_context>

<pallas_src>
import functools

import jax
import jax.numpy as jnp
from jax.experimental import pallas as pl
from jax.experimental.pallas import tpu as pltpu


def _round_up(x: int, m: int) -> int:
    return ((x + m - 1) // m) * m


def _pick_block_rows(n_rows: int, spatial: int,
                     itemsize_a: int, itemsize_s: int) -> int:
    """Rows per grid step.

    Working set per step ~= 2 inputs x 2 pipeline buffers x R*S*itemsize
    (HBM dtype) + ~3 x R*S*4 f32 temporaries (casts + attn*seg).  Kept under
    ~32 MiB so the kernel fits everywhere with vmem_limit_bytes = 48 MiB
    (v7x physical VMEM is only 64 MiB)."""
    vmem_budget = 32 * 1024 * 1024
    bytes_per_row = spatial * (2 * (itemsize_a + itemsize_s) + 3 * 4)
    r = max(vmem_budget // max(bytes_per_row, 1), 1)

    if r >= n_rows:
        if n_rows >= 256:
            # Keep >= 2 grid steps so the v7x megacore can split the row axis.
            return _round_up(pl.cdiv(n_rows, 2), 128)
        # One full-extent block: always layout-legal, single grid step.
        return n_rows

    if r >= 128:
        # Lane-dense (1, 1, R) output blocks; unmasked stores.
        return (r // 128) * 128

    # Pathological huge-S fallback (S alone blows the 128-row budget):
    # sub-128 row blocks => masked output stores, but still correct.
    # Alignment must respect the narrowest input dtype's sublane packing.
    # TODO(synk): add an inner "arbitrary" S-chunk grid axis with a scratch
    # accumulator to keep R >= 128 for very large S.
    sublane = max(8, 32 // max(min(itemsize_a, itemsize_s), 1))
    return max(sublane, (r // sublane) * sublane)


def _balanced_l1_kernel(attn_ref, seg_ref, out_ref, *, normalize: bool,
                        spatial_size: float):
    # attn_ref / seg_ref: (1, R, S) tiles in VMEM; out_ref: (1, 1, R).
    attn = attn_ref[...].astype(jnp.float32)
    seg = seg_ref[...].astype(jnp.float32)

    # Three S-wide reductions; background terms recovered algebraically.
    sum_attn = jnp.sum(attn, axis=2)                 # (1, R)
    sum_seg = jnp.sum(seg, axis=2)                   # (1, R)
    sum_attn_seg = jnp.sum(attn * seg, axis=2)       # (1, R)

    bg_sum = (spatial_size - sum_seg) + 1e-5         # == sum(1 - seg) + 1e-5
    obj_sum = sum_seg + 1e-5

    # Exact reciprocals (approx=False) keep agreement tight with the reference
    # divide while turning the per-row divides into recip + multiply.
    background_loss = (sum_attn - sum_attn_seg) * pl.reciprocal(bg_sum)
    object_loss = sum_attn_seg * pl.reciprocal(obj_sum)
    loss = background_loss - object_loss             # (1, R)

    if normalize:
        # Per-row scale factored out of all linear sums: applied once to the
        # final (1, R) loss instead of dividing the whole (R, S) tile.
        row_max = jnp.max(attn, axis=2)              # (1, R)
        loss = loss * pl.reciprocal(row_max + 1e-5)

    out_ref[...] = loss[:, None, :]                  # (1, 1, R)


def balanced_l1_loss(object_token_attn_prob, object_segmaps,
                     threshold: float = 1.0, normalize: bool = False,
                     block_rows=None):
    # `threshold` is kept for parity with the PyTorch module; unused in forward.
    del threshold
    B, T, S = object_token_attn_prob.shape
    assert object_segmaps.shape == (B, T, S)
    N = B * T

    it_a = jnp.dtype(object_token_attn_prob.dtype).itemsize
    it_s = jnp.dtype(object_segmaps.dtype).itemsize
    R = block_rows if block_rows is not None else _pick_block_rows(N, S, it_a, it_s)
    num_blocks = pl.cdiv(N, R)

    # Free metadata-only views; no padding.  The tail block (when N % R != 0)
    # reads unspecified rows whose outputs are sliced off below.
    attn = object_token_attn_prob.reshape(1, N, S)
    seg = object_segmaps.reshape(1, N, S)

    cost = pl.CostEstimate(
        flops=4 * N * S,
        transcendentals=0,
        bytes_accessed=N * S * (it_a + it_s) + 4 * N)

    out = pl.pallas_call(
        functools.partial(_balanced_l1_kernel, normalize=normalize,
                          spatial_size=float(S)),
        out_shape=jax.ShapeDtypeStruct((num_blocks, 1, R), jnp.float32),
        grid=(num_blocks,),
        in_specs=[
            pl.BlockSpec((1, R, S), lambda i: (0, i, 0)),
            pl.BlockSpec((1, R, S), lambda i: (0, i, 0)),
        ],
        out_specs=pl.BlockSpec((1, 1, R), lambda i: (i, 0, 0)),
        compiler_params=pltpu.CompilerParams(
            dimension_semantics=("parallel",),
            vmem_limit_bytes=48 * 1024 * 1024),
        cost_estimate=cost,
    )(attn, seg)

    # (num_blocks, 1, R) -> flat rows; drop the tail-block garbage rows.
    return out.reshape(num_blocks * R)[:N].reshape(B, T)


def _reference(attn, seg, normalize=False):
    attn = attn.astype(jnp.float32)
    seg = seg.astype(jnp.float32)
    if normalize:
        attn = attn / (jnp.max(attn, axis=2, keepdims=True) + 1e-5)
    bg = 1.0 - seg
    bg_sum = jnp.sum(bg, axis=2) + 1e-5
    obj_sum = jnp.sum(seg, axis=2) + 1e-5
    return (jnp.sum(attn * bg, axis=2) / bg_sum
            - jnp.sum(attn * seg, axis=2) / obj_sum)


if __name__ == "__main__":
    key = jax.random.PRNGKey(0)
    k1, k2, k3, k4 = jax.random.split(key, 4)

    # --- primary small test: B=2, T=8, S=256 (e.g. 16x16 spatial) ---
    B, T, S = 2, 8, 256
    logits = jax.random.normal(k1, (B, T, S), dtype=jnp.float32)
    attn = jax.nn.softmax(logits, axis=-1)
    seg = (jax.random.uniform(k2, (B, T, S)) > 0.5).astype(jnp.float32)

    for normalize in (False, True):
        out = jax.block_until_ready(
            balanced_l1_loss(attn, seg, threshold=1.0, normalize=normalize))
        ref = _reference(attn, seg, normalize=normalize)
        assert out.shape == (B, T)
        assert jnp.allclose(out, ref, atol=1e-5, rtol=1e-5), (normalize, out, ref)

    # --- multi-block + ragged tail path (forced small block_rows, no padding) ---
    B2, T2, S2 = 2, 21, 128          # N = 42 rows -> 6 blocks of 8, last partial
    logits2 = jax.random.normal(k3, (B2, T2, S2), dtype=jnp.float32)
    attn2 = jax.nn.softmax(logits2, axis=-1)
    seg2 = (jax.random.uniform(k4, (B2, T2, S2)) > 0.5).astype(jnp.float32)
    for normalize in (False, True):
        out2 = jax.block_until_ready(
            balanced_l1_loss(attn2, seg2, normalize=normalize, block_rows=8))
        ref2 = _reference(attn2, seg2, normalize=normalize)
        assert out2.shape == (B2, T2)
        assert jnp.allclose(out2, ref2, atol=1e-5, rtol=1e-5), (out2, ref2)

    print("KERNEL_OK")
</pallas_src>

<mosaic_0001>
module attributes {stable_mosaic.version = 11 : i64} {
  func.func @_balanced_l1_kernel(%arg0: i32, %arg1: memref<1x16x256xf32, #tpu.memory_space<vmem>>, %arg2: memref<1x16x256xf32, #tpu.memory_space<vmem>>, %arg3: memref<1x1x16xf32, #tpu.memory_space<vmem>>) attributes {dimension_semantics = [#tpu.dimension_semantics<parallel>], iteration_bounds = array<i64: 1>, scalar_prefetch = 0 : i64, scratch_operands = 0 : i64, tpu.core_type = #tpu.core_type<tc>, window_params = [{transform_indices = @transform_0, window_bounds = array<i64: 1, 16, 256>}, {transform_indices = @transform_1, window_bounds = array<i64: 1, 16, 256>}, {transform_indices = @transform_2, window_bounds = array<i64: 1, 1, 16>}]} {
    %c0 = arith.constant 0 : index
    %c0_0 = arith.constant 0 : index
    %c0_1 = arith.constant 0 : index
    %0 = vector.load %arg1[%c0, %c0_0, %c0_1] : memref<1x16x256xf32, #tpu.memory_space<vmem>>, vector<1x16x256xf32>
    %c0_2 = arith.constant 0 : index
    %c0_3 = arith.constant 0 : index
    %c0_4 = arith.constant 0 : index
    %1 = vector.load %arg2[%c0_2, %c0_3, %c0_4] : memref<1x16x256xf32, #tpu.memory_space<vmem>>, vector<1x16x256xf32>
    %cst = arith.constant dense<0.000000e+00> : vector<1x16xf32>
    %2 = vector.multi_reduction <add>, %0, %cst [2] : vector<1x16x256xf32> to vector<1x16xf32>
    %cst_5 = arith.constant dense<0.000000e+00> : vector<1x16xf32>
    %3 = vector.multi_reduction <add>, %1, %cst_5 [2] : vector<1x16x256xf32> to vector<1x16xf32>
    %4 = arith.mulf %0, %1 : vector<1x16x256xf32>
    %cst_6 = arith.constant dense<0.000000e+00> : vector<1x16xf32>
    %5 = vector.multi_reduction <add>, %4, %cst_6 [2] : vector<1x16x256xf32> to vector<1x16xf32>
    %cst_7 = arith.constant 2.560000e+02 : f32
    %6 = vector.broadcast %cst_7 : f32 to vector<1x16xf32>
    %7 = arith.subf %6, %3 : vector<1x16xf32>
    %cst_8 = arith.constant 9.99999974E-6 : f32
    %8 = vector.broadcast %cst_8 : f32 to vector<1x16xf32>
    %9 = arith.addf %7, %8 : vector<1x16xf32>
    %cst_9 = arith.constant 9.99999974E-6 : f32
    %10 = vector.broadcast %cst_9 : f32 to vector<1x16xf32>
    %11 = arith.addf %3, %10 : vector<1x16xf32>
    %12 = arith.subf %2, %5 : vector<1x16xf32>
    %13 = tpu.reciprocal %9 : vector<1x16xf32> -> vector<1x16xf32>
    %14 = arith.mulf %12, %13 : vector<1x16xf32>
    %15 = tpu.reciprocal %11 : vector<1x16xf32> -> vector<1x16xf32>
    %16 = arith.mulf %5, %15 : vector<1x16xf32>
    %17 = arith.subf %14, %16 : vector<1x16xf32>
    %18 = vector.shape_cast %17 : vector<1x16xf32> to vector<1x1x16xf32>
    %c0_10 = arith.constant 0 : index
    %c0_11 = arith.constant 0 : index
    %c0_12 = arith.constant 0 : index
    %19 = vector.load %arg3[%c0_10, %c0_11, %c0_12] : memref<1x1x16xf32, #tpu.memory_space<vmem>>, vector<1x1x16xf32>
    tpu.vector_store %arg3[%c0_10, %c0_11, %c0_12], %18 {strides = array<i32>} : memref<1x1x16xf32, #tpu.memory_space<vmem>>, vector<1x1x16xf32>,
    return
  }
  func.func @transform_0(%arg0: i32) -> (i32, i32, i32) {
    %c0_i32 = arith.constant 0 : i32
    %c0_i32_0 = arith.constant 0 : i32
    %c0_i32_1 = arith.constant 0 : i32
    return %c0_i32, %arg0, %c0_i32_0 : i32, i32, i32
  }
  func.func @transform_1(%arg0: i32) -> (i32, i32, i32) {
    %c0_i32 = arith.constant 0 : i32
    %c0_i32_0 = arith.constant 0 : i32
    %c0_i32_1 = arith.constant 0 : i32
    return %c0_i32, %arg0, %c0_i32_0 : i32, i32, i32
  }
  func.func @transform_2(%arg0: i32) -> (i32, i32, i32) {
    %c0_i32 = arith.constant 0 : i32
    %c0_i32_0 = arith.constant 0 : i32
    %c0_i32_1 = arith.constant 0 : i32
    return %arg0, %c0_i32, %c0_i32_0 : i32, i32, i32
  }
}

</mosaic_0001>

<llo_original>
// kernel: tpu_custom_call.1
$region0: #{tpu_custom_call.1}
  #allocation0 [shape = 'u32[]', space=smem, size = 0x4, offset = 0x4, fixed_abs, tag = 'smem constant byte address 0x4 - core index']
  #allocation1 [shape = 'u32[72,128]{1,0:T(1,128)}', space=vmem, size = 0x9000, scoped, tag = 'internal scratch']
  %s0 = inlined_call_operand.hbm [shape: f32[1,16,256], index: 0, kind: input, shape index: {}]
  %s1 = inlined_call_operand.hbm [shape: f32[1,16,256], index: 1, kind: input, shape index: {}]
  %s2 = inlined_call_operand.hbm [shape: f32[1,1,16], index: 2, kind: output, shape index: {}]
  %s3 = sld [smem:[#allocation0]]
  $region26: #{tpu_custom_call.1} parent=0
    _
  %s5 = ssub.s32 1, %s3
  %s6 = scalar_select 0, %s5, %s3
  $region1: #{tpu_custom_call.1} parent=0
    #allocation2 [shape = 'u8[16384]{0}', space=vmem, size = 0x4000, scoped, tag = 'input window, operand 0, single buffered']
    #allocation3 [shape = 's32[1]{0}', space=sflag, size = 0x4, scoped, tag = 'scoped memory for tpu_custom_call.1']
    #allocation4 [shape = 's32[1]{0}', space=sflag, size = 0x4, scoped, tag = 'scoped memory for tpu_custom_call.1']
    #allocation5 [shape = 'u8[16384]{0}', space=vmem, size = 0x4000, scoped, tag = 'input window, operand 1, single buffered']
    #allocation6 [shape = 's32[1]{0}', space=sflag, size = 0x4, scoped, tag = 'scoped memory for tpu_custom_call.1']
    #allocation7 [shape = 'u8[512]{0}', space=vmem, size = 0x400, scoped, tag = 'output window, operand 0, single buffered']
    %7 = vsyncpa [#allocation3], 0
    %8 = vsyncpa [#allocation6], 0
    %9 = vsyncpa [#allocation4], 0
    // Predicated region
    $region2: #{tpu_custom_call.1} parent=1 // pred_check
      _
    $region3: #{tpu_custom_call.1} parent=1 // pred_check_branch
      %11 = sbr.rel (0) target = $region5
    $region4: #{tpu_custom_call.1} parent=1 // pred_region
      %13 = vsyncadd [#allocation3], 0
      %s14 = sshll.u32 %s0, 4
      %s15 = int_to_ptr.hbm [resolvable:$true] %s14
      %s16 = sshll.u32 [#allocation2], 4
      %s17 = int_to_ptr.vmem [resolvable:$true] %s16
      %22 = dma.hbm_to_vmem [thread:$0]  %s15, 512, %s17, [#allocation3], 256, 256, 16
    $region5: #{tpu_custom_call.1} parent=1 // pred_fallthru
      _
    // Predicated region
    $region6: #{tpu_custom_call.1} parent=1 // pred_check
      _
    $region7: #{tpu_custom_call.1} parent=1 // pred_check_branch
      %24 = sbr.rel (0) target = $region9
    $region8: #{tpu_custom_call.1} parent=1 // pred_region
      %26 = vsyncadd [#allocation6], 0
      %s27 = sshll.u32 %s1, 4
      %s28 = int_to_ptr.hbm [resolvable:$true] %s27
      %s29 = sshll.u32 [#allocation5], 4
      %s30 = int_to_ptr.vmem [resolvable:$true] %s29
      %35 = dma.hbm_to_vmem [thread:$0]  %s28, 512, %s30, [#allocation6], 256, 256, 16
    $region9: #{tpu_custom_call.1} parent=1 // pred_fallthru
      _
    // Predicated region
    $region10: #{tpu_custom_call.1} parent=1 // pred_check
      _
    $region11: #{tpu_custom_call.1} parent=1 // pred_check_branch
      %37 = sbr.rel (0) target = $region13
    $region12: #{tpu_custom_call.1} parent=1 // pred_region
      %39 = dma.done [#allocation3], 512
    $region13: #{tpu_custom_call.1} parent=1 // pred_fallthru
      _
    // Predicated region
    $region14: #{tpu_custom_call.1} parent=1 // pred_check
      _
    $region15: #{tpu_custom_call.1} parent=1 // pred_check_branch
      %41 = sbr.rel (0) target = $region17
    $region16: #{tpu_custom_call.1} parent=1 // pred_region
      %43 = dma.done [#allocation6], 512
    $region17: #{tpu_custom_call.1} parent=1 // pred_fallthru
      _
    %v44 = vld [vmem:[#allocation2] sm:$0xff]
    %v45 = vld [vmem:[#allocation2 + $0x8] sm:$0xff]
    %v46 = vld [vmem:[#allocation2 + $0x10] sm:$0xff]
    %v47 = vld [vmem:[#allocation2 + $0x18] sm:$0xff]
    %v48 = vld [vmem:[#allocation5] sm:$0xff]
    %v49 = vld [vmem:[#allocation5 + $0x8] sm:$0xff]
    %v50 = vld [vmem:[#allocation5 + $0x10] sm:$0xff]
    %v51 = vld [vmem:[#allocation5 + $0x18] sm:$0xff]
    %v52 = vadd.f32 %v44, %v45
    %53 = vadd.xlane.f32.xlu0 %v52
    %v54 = vpop.xlane.xlu0 %53
    %v55 = vadd.f32 %v46, %v47
    %56 = vadd.xlane.f32.xlu0 %v55
    %v57 = vpop.xlane.xlu0 %56
    %v58 = vadd.f32 %v48, %v49
    %59 = vadd.xlane.f32.xlu0 %v58
    %v60 = vpop.xlane.xlu0 %59
    %v61 = vadd.f32 %v50, %v51
    %62 = vadd.xlane.f32.xlu0 %v61
    %v63 = vpop.xlane.xlu0 %62
    %v64 = vmul.f32 %v44, %v48
    %v65 = vmul.f32 %v45, %v49
    %v66 = vmul.f32 %v46, %v50
    %v67 = vmul.f32 %v47, %v51
    %v68 = vadd.f32 %v64, %v65
    %69 = vadd.xlane.f32.xlu0 %v68
    %v70 = vpop.xlane.xlu0 %69
    %v71 = vadd.f32 %v66, %v67
    %72 = vadd.xlane.f32.xlu0 %v71
    %v73 = vpop.xlane.xlu0 %72
    %v74 = vsub.f32 256.0, %v60
    %v75 = vsub.f32 256.0, %v63
    %v76 = vadd.f32 %v74, 1e-05
    %v77 = vadd.f32 %v75, 1e-05
    %v78 = vadd.f32 %v60, 1e-05
    %v79 = vadd.f32 %v63, 1e-05
    %v80 = vsub.f32 %v54, %v70
    %v81 = vsub.f32 %v57, %v73
    %v82 = vrcp.pop %v76
    %v83 = vmul.f32 %v76, %v82
    %v84 = vsub.f32 1.0, %v83
    %v85 = vmul.f32 %v82, %v84
    %v86 = vadd.f32 %v82, %v85
    %vm87 = vweird.f32 %v76
    %vm88 = vweird.f32 %v82
    %vm89 = vmor %vm87, %vm88
    %v90 = vsel %vm89, %v82, %v86
    %v91 = vand.u32 2147483647, %v76
    %vm92 = vcmp.eq.f32.partialorder %v91, 8.507059e+37
    %v93 = vand.u32 %v76, 2147483648
    %v94 = vor.u32 1.1754944e-38, %v93
    %v95 = vsel %vm92, %v94, %v90
    %v96 = vrcp.pop %v77
    %v97 = vmul.f32 %v77, %v96
    %v98 = vsub.f32 1.0, %v97
    %v99 = vmul.f32 %v96, %v98
    %v100 = vadd.f32 %v96, %v99
    %vm101 = vweird.f32 %v77
    %vm102 = vweird.f32 %v96
    %vm103 = vmor %vm101, %vm102
    %v104 = vsel %vm103, %v96, %v100
    %v105 = vand.u32 2147483647, %v77
    %vm106 = vcmp.eq.f32.partialorder %v105, 8.507059e+37
    %v107 = vand.u32 %v77, 2147483648
    %v108 = vor.u32 1.1754944e-38, %v107
    %v109 = vsel %vm106, %v108, %v104
    %v110 = vmul.f32 %v80, %v95
    %v111 = vmul.f32 %v81, %v109
    %v112 = vrcp.pop %v78
    %v113 = vmul.f32 %v78, %v112
    %v114 = vsub.f32 1.0, %v113
    %v115 = vmul.f32 %v112, %v114
    %v116 = vadd.f32 %v112, %v115
    %vm117 = vweird.f32 %v78
    %vm118 = vweird.f32 %v112
    %vm119 = vmor %vm117, %vm118
    %v120 = vsel %vm119, %v112, %v116
    %v121 = vand.u32 2147483647, %v78
    %vm122 = vcmp.eq.f32.partialorder %v121, 8.507059e+37
    %v123 = vand.u32 %v78, 2147483648
    %v124 = vor.u32 1.1754944e-38, %v123
    %v125 = vsel %vm122, %v124, %v120
    %v126 = vrcp.pop %v79
    %v127 = vmul.f32 %v79, %v126
    %v128 = vsub.f32 1.0, %v127
    %v129 = vmul.f32 %v126, %v128
    %v130 = vadd.f32 %v126, %v129
    %vm131 = vweird.f32 %v79
    %vm132 = vweird.f32 %v126
    %vm133 = vmor %vm131, %vm132
    %v134 = vsel %vm133, %v126, %v130
    %v135 = vand.u32 2147483647, %v79
    %vm136 = vcmp.eq.f32.partialorder %v135, 8.507059e+37
    %v137 = vand.u32 %v79, 2147483648
    %v138 = vor.u32 1.1754944e-38, %v137
    %v139 = vsel %vm136, %v138, %v134
    %v140 = vmul.f32 %v70, %v125
    %v141 = vmul.f32 %v73, %v139
    %v142 = vsub.f32 %v110, %v140
    %v143 = vsub.f32 %v111, %v141
    %v146 = vlaneseq
    %v147 = vand.u32 %v146, 127
    %v148 = vperm.slane %v142, %v147
    %v149 = vadd.s32 %v147, 4294967288
    %v150 = vperm.slane %v143, %v149
    %vm151 = vcmask 130112
    %v152 = vsel %vm151, %v150, %v148
    %vm154 = vcmask 122880
    %155 = vst.msk [vmem:[#allocation7] sm:$0x1] %vm154, %v152
    // Predicated region
    $region18: #{tpu_custom_call.1} parent=1 // pred_check
      _
    $region19: #{tpu_custom_call.1} parent=1 // pred_check_branch
      %157 = sbr.rel (0) target = $region21
    $region20: #{tpu_custom_call.1} parent=1 // pred_region
      %159 = vsyncadd [#allocation4], 0
      %s161 = sshll.u32 [#allocation7], 4
      %s162 = int_to_ptr.vmem [resolvable:$true] %s161
      %s163 = sshll.u32 %s2, 4
      %s164 = int_to_ptr.hbm [resolvable:$true] %s163
      %166 = dma.vmem_to_hbm [thread:$0]  %s162, 16, %s164, [#allocation4]
    $region21: #{tpu_custom_call.1} parent=1 // pred_fallthru
      _
    // Predicated region
    $region22: #{tpu_custom_call.1} parent=1 // pred_check
      _
    $region23: #{tpu_custom_call.1} parent=1 // pred_check_branch
      %168 = sbr.rel (0) target = $region25
    $region24: #{tpu_custom_call.1} parent=1 // pred_region
      %170 = dma.done [#allocation4], 16
    $region25: #{tpu_custom_call.1} parent=1 // pred_fallthru
      _
    %171 = vsyncpa [#allocation3], 1
    %172 = vsyncpa [#allocation6], 1
    %173 = vsyncpa [#allocation4], 1

</llo_original>
